<compile_context>
chip_gen: v7x
topology: tpu7x:2x2x1
jax: 0.10.0
libtpu: 0.0.40
codegen_flags: <defaults>
</compile_context>

<pallas_src>
import jax
import jax.numpy as jnp
from jax.experimental import pallas as pl
from jax.experimental.pallas import tpu as pltpu

NUM_STATES = 13
NUM_ACTIONS = 5

# Frozen "random" structure (netType = 2): l = [5, 6, 5]
LAYER1 = 2 ** 5   # 32
LAYER2 = 2 ** 6   # 64
LAYER3 = 2 ** 5   # 32
# Frozen activations: [relu, tanh, sigmoid]

LANE = 128
SUBLANE = 8
TB_MAX = 2048     # batch tile: amortizes per-step overhead, safe VMEM on all gens


def _pad_to(n, m):
    return ((n + m - 1) // m) * m


def _pad2d(a, rows, cols):
    r, c = a.shape
    return jnp.pad(a, ((0, rows - r), (0, cols - c)))


# Padded (lane-aligned) hidden widths.  Output width stays at NUM_ACTIONS.
H1 = _pad_to(LAYER1, LANE)        # 128
H2 = _pad_to(LAYER2, LANE)        # 128
H3 = _pad_to(LAYER3, LANE)        # 128


def mlp_kernel(x_ref, w1_ref, b1_ref, w2_ref, b2_ref,
               w3_ref, b3_ref, wo_ref, bo_ref, o_ref):
    """One batch tile per grid step; weights stay VMEM-resident across steps."""
    x = x_ref[...]                                        # (TB, 13)

    # fc1 + relu   (act_type[0]); K=13 dot, Mosaic masks the contraction.
    h = jnp.dot(x, w1_ref[...], preferred_element_type=jnp.float32) + b1_ref[...]
    h = jnp.maximum(h, 0.0)

    # fc2 + tanh   (act_type[1])
    h = jnp.dot(h, w2_ref[...], preferred_element_type=jnp.float32) + b2_ref[...]
    h = jnp.tanh(h)

    # fc3 + sigmoid (act_type[2])
    h = jnp.dot(h, w3_ref[...], preferred_element_type=jnp.float32) + b3_ref[...]
    h = jax.nn.sigmoid(h)

    # out (no activation; raw Q values, as in the PyTorch module).
    # Narrow (TB, 5) store: masked vst, but HBM traffic is only the real data.
    o_ref[...] = (jnp.dot(h, wo_ref[...], preferred_element_type=jnp.float32)
                  + bo_ref[...])


def prepare_params(params):
    """One-time parameter prep (call once at init, NOT per forward call):
    transpose PyTorch-style [out, in] weights to [in, out] and zero-pad the
    *hidden* output features to lane width.  Zero padding is correctness-safe:
    padded weight rows/cols are zero, so nonzero pad-lane activations
    (sigmoid(0)=0.5) multiply zero rows of the next weight and never leak into
    real outputs.  The final layer keeps its real width (NUM_ACTIONS)."""
    w1 = params["w1"].T    # (13, 32)   -> keep K=13 unpadded
    w2 = params["w2"].T    # (32, 64)
    w3 = params["w3"].T    # (64, 32)
    wo = params["wo"].T    # (32, 5)
    return {
        "w1": _pad2d(w1, NUM_STATES, H1),
        "w2": _pad2d(w2, H1, H2),
        "w3": _pad2d(w3, H2, H3),
        "wo": _pad2d(wo, H3, NUM_ACTIONS),
        "b1": _pad2d(params["b1"][None, :], 1, H1),
        "b2": _pad2d(params["b2"][None, :], 1, H2),
        "b3": _pad2d(params["b3"][None, :], 1, H3),
        "bo": params["bo"][None, :],                      # (1, 5)
    }


@jax.jit
def net_forward(x, prep):
    """x: [B, NUM_STATES] float32.  prep: output of prepare_params()."""
    B = x.shape[0]

    # Batch tile: sublane-aligned, capped so double-buffered x/out tiles plus
    # the resident weight tiles stay well inside scoped VMEM on all chips.
    TB = min(TB_MAX, _pad_to(B, SUBLANE))
    grid = (pl.cdiv(B, TB),)           # ragged edge block handled by Pallas
    const = lambda i: (0, 0)           # weights/biases: fetched once, resident

    return pl.pallas_call(
        mlp_kernel,
        out_shape=jax.ShapeDtypeStruct((B, NUM_ACTIONS), jnp.float32),
        grid=grid,
        in_specs=[
            pl.BlockSpec((TB, NUM_STATES), lambda i: (i, 0)),   # x tile
            pl.BlockSpec((NUM_STATES, H1), const),              # w1
            pl.BlockSpec((1, H1), const),                       # b1
            pl.BlockSpec((H1, H2), const),                      # w2
            pl.BlockSpec((1, H2), const),                       # b2
            pl.BlockSpec((H2, H3), const),                      # w3
            pl.BlockSpec((1, H3), const),                       # b3
            pl.BlockSpec((H3, NUM_ACTIONS), const),             # wo
            pl.BlockSpec((1, NUM_ACTIONS), const),              # bo
        ],
        out_specs=pl.BlockSpec((TB, NUM_ACTIONS), lambda i: (i, 0)),
        compiler_params=pltpu.CompilerParams(
            dimension_semantics=("parallel",),
            vmem_limit_bytes=32 * 1024 * 1024,
        ),
    )(x, prep["w1"], prep["b1"], prep["w2"], prep["b2"],
      prep["w3"], prep["b3"], prep["wo"], prep["bo"])


def init_params(key):
    """Deterministic parameter init matching the module's shapes.
    Weights ~ N(0, 0.1) like .normal_(0, 0.1); biases small uniform."""
    ks = jax.random.split(key, 8)
    def w(k, o, i):
        return 0.1 * jax.random.normal(k, (o, i), dtype=jnp.float32)
    def b(k, o):
        return 0.01 * jax.random.uniform(k, (o,), dtype=jnp.float32,
                                         minval=-1.0, maxval=1.0)
    return {
        "w1": w(ks[0], LAYER1, NUM_STATES), "b1": b(ks[1], LAYER1),
        "w2": w(ks[2], LAYER2, LAYER1),     "b2": b(ks[3], LAYER2),
        "w3": w(ks[4], LAYER3, LAYER2),     "b3": b(ks[5], LAYER3),
        "wo": w(ks[6], NUM_ACTIONS, LAYER3),"bo": b(ks[7], NUM_ACTIONS),
    }


def net_forward_ref(x, p):
    """Pure-JAX reference (mirrors the PyTorch forward for netType=2)."""
    h = jnp.maximum(x @ p["w1"].T + p["b1"], 0.0)
    h = jnp.tanh(h @ p["w2"].T + p["b2"])
    h = jax.nn.sigmoid(h @ p["w3"].T + p["b3"])
    return h @ p["wo"].T + p["bo"]


if __name__ == "__main__":
    key = jax.random.PRNGKey(0)
    kx, kp = jax.random.split(key)

    B = 4
    x = jax.random.normal(kx, (B, NUM_STATES), dtype=jnp.float32)
    params = init_params(kp)
    prep = prepare_params(params)          # one-time prep, outside the hot path

    out = net_forward(x, prep)
    out = jax.block_until_ready(out)

    ref = net_forward_ref(x, params)
    assert out.shape == (B, NUM_ACTIONS), out.shape
    assert jnp.allclose(out, ref, atol=1e-5, rtol=1e-5), (
        f"max abs err {jnp.max(jnp.abs(out - ref))}")

    # Second check: batch that is NOT a multiple of TB and spans multiple grid
    # steps (exercises the ragged edge block and the narrow output store).
    B2 = 2500
    x2 = jax.random.normal(kx, (B2, NUM_STATES), dtype=jnp.float32)
    out2 = jax.block_until_ready(net_forward(x2, prep))
    ref2 = net_forward_ref(x2, params)
    assert out2.shape == (B2, NUM_ACTIONS), out2.shape
    assert jnp.allclose(out2, ref2, atol=1e-5, rtol=1e-5), (
        f"max abs err {jnp.max(jnp.abs(out2 - ref2))}")

    print("KERNEL_OK")
</pallas_src>

<mosaic_0001>
module attributes {stable_mosaic.version = 11 : i64} {
  func.func @mlp_kernel(%arg0: i32, %arg1: memref<8x13xf32, #tpu.memory_space<vmem>>, %arg2: memref<13x128xf32, #tpu.memory_space<vmem>>, %arg3: memref<1x128xf32, #tpu.memory_space<vmem>>, %arg4: memref<128x128xf32, #tpu.memory_space<vmem>>, %arg5: memref<1x128xf32, #tpu.memory_space<vmem>>, %arg6: memref<128x128xf32, #tpu.memory_space<vmem>>, %arg7: memref<1x128xf32, #tpu.memory_space<vmem>>, %arg8: memref<128x5xf32, #tpu.memory_space<vmem>>, %arg9: memref<1x5xf32, #tpu.memory_space<vmem>>, %arg10: memref<8x5xf32, #tpu.memory_space<vmem>>) attributes {dimension_semantics = [#tpu.dimension_semantics<parallel>], iteration_bounds = array<i64: 1>, scalar_prefetch = 0 : i64, scratch_operands = 0 : i64, tpu.core_type = #tpu.core_type<tc>, window_params = [{transform_indices = @transform_0, window_bounds = array<i64: 8, 13>}, {pipeline_mode = #tpu.pipeline_mode<synchronous>, transform_indices = @transform_1, window_bounds = array<i64: 13, 128>}, {pipeline_mode = #tpu.pipeline_mode<synchronous>, transform_indices = @transform_2, window_bounds = array<i64: 1, 128>}, {pipeline_mode = #tpu.pipeline_mode<synchronous>, transform_indices = @transform_3, window_bounds = array<i64: 128, 128>}, {pipeline_mode = #tpu.pipeline_mode<synchronous>, transform_indices = @transform_4, window_bounds = array<i64: 1, 128>}, {pipeline_mode = #tpu.pipeline_mode<synchronous>, transform_indices = @transform_5, window_bounds = array<i64: 128, 128>}, {pipeline_mode = #tpu.pipeline_mode<synchronous>, transform_indices = @transform_6, window_bounds = array<i64: 1, 128>}, {pipeline_mode = #tpu.pipeline_mode<synchronous>, transform_indices = @transform_7, window_bounds = array<i64: 128, 5>}, {pipeline_mode = #tpu.pipeline_mode<synchronous>, transform_indices = @transform_8, window_bounds = array<i64: 1, 5>}, {transform_indices = @transform_9, window_bounds = array<i64: 8, 5>}]} {
    %c0 = arith.constant 0 : index
    %c0_0 = arith.constant 0 : index
    %0 = vector.load %arg1[%c0, %c0_0] : memref<8x13xf32, #tpu.memory_space<vmem>>, vector<8x13xf32>
    %c0_1 = arith.constant 0 : index
    %c0_2 = arith.constant 0 : index
    %1 = vector.load %arg2[%c0_1, %c0_2] : memref<13x128xf32, #tpu.memory_space<vmem>>, vector<13x128xf32>
    %cst = arith.constant dense<0.000000e+00> : vector<8x128xf32>
    %2 = tpu.matmul %0, %1, %cst {dimension_numbers = #tpu.dot_dimension_numbers<[1], [0], [0], [1], [0, 0, 1, 1], [], []>} : vector<8x13xf32>, vector<13x128xf32>, vector<8x128xf32> -> vector<8x128xf32>
    %c0_3 = arith.constant 0 : index
    %c0_4 = arith.constant 0 : index
    %3 = vector.load %arg3[%c0_3, %c0_4] : memref<1x128xf32, #tpu.memory_space<vmem>>, vector<1x128xf32>
    %4 = vector.broadcast %3 : vector<1x128xf32> to vector<8x128xf32>
    %5 = arith.addf %2, %4 : vector<8x128xf32>
    %cst_5 = arith.constant 0.000000e+00 : f32
    %6 = vector.broadcast %cst_5 : f32 to vector<8x128xf32>
    %7 = arith.maximumf %5, %6 : vector<8x128xf32>
    %c0_6 = arith.constant 0 : index
    %c0_7 = arith.constant 0 : index
    %8 = vector.load %arg4[%c0_6, %c0_7] : memref<128x128xf32, #tpu.memory_space<vmem>>, vector<128x128xf32>
    %cst_8 = arith.constant dense<0.000000e+00> : vector<8x128xf32>
    %9 = tpu.matmul %7, %8, %cst_8 {dimension_numbers = #tpu.dot_dimension_numbers<[1], [0], [0], [1], [0, 0, 1, 1], [], []>} : vector<8x128xf32>, vector<128x128xf32>, vector<8x128xf32> -> vector<8x128xf32>
    %c0_9 = arith.constant 0 : index
    %c0_10 = arith.constant 0 : index
    %10 = vector.load %arg5[%c0_9, %c0_10] : memref<1x128xf32, #tpu.memory_space<vmem>>, vector<1x128xf32>
    %11 = vector.broadcast %10 : vector<1x128xf32> to vector<8x128xf32>
    %12 = arith.addf %9, %11 : vector<8x128xf32>
    %13 = math.tanh %12 : vector<8x128xf32>
    %c0_11 = arith.constant 0 : index
    %c0_12 = arith.constant 0 : index
    %14 = vector.load %arg6[%c0_11, %c0_12] : memref<128x128xf32, #tpu.memory_space<vmem>>, vector<128x128xf32>
    %cst_13 = arith.constant dense<0.000000e+00> : vector<8x128xf32>
    %15 = tpu.matmul %13, %14, %cst_13 {dimension_numbers = #tpu.dot_dimension_numbers<[1], [0], [0], [1], [0, 0, 1, 1], [], []>} : vector<8x128xf32>, vector<128x128xf32>, vector<8x128xf32> -> vector<8x128xf32>
    %c0_14 = arith.constant 0 : index
    %c0_15 = arith.constant 0 : index
    %16 = vector.load %arg7[%c0_14, %c0_15] : memref<1x128xf32, #tpu.memory_space<vmem>>, vector<1x128xf32>
    %17 = vector.broadcast %16 : vector<1x128xf32> to vector<8x128xf32>
    %18 = arith.addf %15, %17 : vector<8x128xf32>
    %19 = arith.negf %18 : vector<8x128xf32>
    %20 = math.exp %19 : vector<8x128xf32>
    %cst_16 = arith.constant 1.000000e+00 : f32
    %21 = vector.broadcast %cst_16 : f32 to vector<8x128xf32>
    %22 = arith.addf %21, %20 : vector<8x128xf32>
    %23 = arith.divf %21, %22 : vector<8x128xf32>
    %c0_17 = arith.constant 0 : index
    %c0_18 = arith.constant 0 : index
    %24 = vector.load %arg8[%c0_17, %c0_18] : memref<128x5xf32, #tpu.memory_space<vmem>>, vector<128x5xf32>
    %cst_19 = arith.constant dense<0.000000e+00> : vector<8x5xf32>
    %25 = tpu.matmul %23, %24, %cst_19 {dimension_numbers = #tpu.dot_dimension_numbers<[1], [0], [0], [1], [0, 0, 1, 1], [], []>} : vector<8x128xf32>, vector<128x5xf32>, vector<8x5xf32> -> vector<8x5xf32>
    %c0_20 = arith.constant 0 : index
    %c0_21 = arith.constant 0 : index
    %26 = vector.load %arg9[%c0_20, %c0_21] : memref<1x5xf32, #tpu.memory_space<vmem>>, vector<1x5xf32>
    %27 = vector.broadcast %26 : vector<1x5xf32> to vector<8x5xf32>
    %28 = arith.addf %25, %27 : vector<8x5xf32>
    %c0_22 = arith.constant 0 : index
    %c0_23 = arith.constant 0 : index
    %29 = vector.load %arg10[%c0_22, %c0_23] : memref<8x5xf32, #tpu.memory_space<vmem>>, vector<8x5xf32>
    tpu.vector_store %arg10[%c0_22, %c0_23], %28 {strides = array<i32>} : memref<8x5xf32, #tpu.memory_space<vmem>>, vector<8x5xf32>,
    return
  }
  func.func @transform_0(%arg0: i32) -> (i32, i32) {
    %c0_i32 = arith.constant 0 : i32
    %c0_i32_0 = arith.constant 0 : i32
    return %arg0, %c0_i32 : i32, i32
  }
  func.func @transform_1(%arg0: i32) -> (i32, i32) {
    %c0_i32 = arith.constant 0 : i32
    %c0_i32_0 = arith.constant 0 : i32
    %c0_i32_1 = arith.constant 0 : i32
    return %c0_i32, %c0_i32_0 : i32, i32
  }
  func.func @transform_2(%arg0: i32) -> (i32, i32) {
    %c0_i32 = arith.constant 0 : i32
    %c0_i32_0 = arith.constant 0 : i32
    %c0_i32_1 = arith.constant 0 : i32
    return %c0_i32, %c0_i32_0 : i32, i32
  }
  func.func @transform_3(%arg0: i32) -> (i32, i32) {
    %c0_i32 = arith.constant 0 : i32
    %c0_i32_0 = arith.constant 0 : i32
    %c0_i32_1 = arith.constant 0 : i32
    return %c0_i32, %c0_i32_0 : i32, i32
  }
  func.func @transform_4(%arg0: i32) -> (i32, i32) {
    %c0_i32 = arith.constant 0 : i32
    %c0_i32_0 = arith.constant 0 : i32
    %c0_i32_1 = arith.constant 0 : i32
    return %c0_i32, %c0_i32_0 : i32, i32
  }
  func.func @transform_5(%arg0: i32) -> (i32, i32) {
    %c0_i32 = arith.constant 0 : i32
    %c0_i32_0 = arith.constant 0 : i32
    %c0_i32_1 = arith.constant 0 : i32
    return %c0_i32, %c0_i32_0 : i32, i32
  }
  func.func @transform_6(%arg0: i32) -> (i32, i32) {
    %c0_i32 = arith.constant 0 : i32
    %c0_i32_0 = arith.constant 0 : i32
    %c0_i32_1 = arith.constant 0 : i32
    return %c0_i32, %c0_i32_0 : i32, i32
  }
  func.func @transform_7(%arg0: i32) -> (i32, i32) {
    %c0_i32 = arith.constant 0 : i32
    %c0_i32_0 = arith.constant 0 : i32
    %c0_i32_1 = arith.constant 0 : i32
    return %c0_i32, %c0_i32_0 : i32, i32
  }
  func.func @transform_8(%arg0: i32) -> (i32, i32) {
    %c0_i32 = arith.constant 0 : i32
    %c0_i32_0 = arith.constant 0 : i32
    %c0_i32_1 = arith.constant 0 : i32
    return %c0_i32, %c0_i32_0 : i32, i32
  }
  func.func @transform_9(%arg0: i32) -> (i32, i32) {
    %c0_i32 = arith.constant 0 : i32
    %c0_i32_0 = arith.constant 0 : i32
    return %arg0, %c0_i32 : i32, i32
  }
}

</mosaic_0001>

<llo_original>
// kernel: net_forward.1
$region0: #{net_forward.1}
  #allocation0 [shape = 'u32[]', space=smem, size = 0x4, offset = 0x4, fixed_abs, tag = 'smem constant byte address 0x4 - core index']
  #allocation1 [shape = 'u32[144,128]{1,0:T(1,128)}', space=vmem, size = 0x12000, scoped, tag = 'internal scratch']
  %s0 = inlined_call_operand.vmem [shape: f32[4,13], index: 0, kind: input, shape index: {}]
  %s1 = inlined_call_operand.vmem [shape: f32[13,128], index: 1, kind: input, shape index: {}]
  %s2 = inlined_call_operand.vmem [shape: f32[1,128], index: 2, kind: input, shape index: {}]
  %s3 = inlined_call_operand.vmem [shape: f32[128,128], index: 3, kind: input, shape index: {}]
  %s4 = inlined_call_operand.vmem [shape: f32[1,128], index: 4, kind: input, shape index: {}]
  %s5 = inlined_call_operand.hbm [shape: f32[128,128], index: 5, kind: input, shape index: {}]
  %s6 = inlined_call_operand.vmem [shape: f32[1,128], index: 6, kind: input, shape index: {}]
  %s7 = inlined_call_operand.vmem [shape: f32[128,5], index: 7, kind: input, shape index: {}]
  %s8 = inlined_call_operand.vmem [shape: f32[1,5], index: 8, kind: input, shape index: {}]
  %s9 = inlined_call_operand.hbm [shape: f32[4,5], index: 9, kind: output, shape index: {}]
  %s10 = sld [smem:[#allocation0]]
  $region50: #{net_forward.1} parent=0
    _
  %s12 = ssub.s32 1, %s10
  %s13 = scalar_select 0, %s12, %s10
  $region1: #{net_forward.1} parent=0
    #allocation2 [shape = 'u8[65536]{0}', space=vmem, size = 0x10000, scoped, tag = 'input window, operand 5, single buffered']
    #allocation3 [shape = 's32[1]{0}', space=sflag, size = 0x4, scoped, tag = 'scoped memory for net_forward.1']
    #allocation4 [shape = 's32[1]{0}', space=sflag, size = 0x4, scoped, tag = 'scoped memory for net_forward.1']
    #allocation5 [shape = 'u8[4096]{0}', space=vmem, size = 0x1000, scoped, tag = 'output window, operand 0, single buffered']
    %14 = vsyncpa [#allocation3], 0
    %15 = vsyncpa [#allocation4], 0
    // Predicated region
    $region2: #{net_forward.1} parent=1 // pred_check
      _
    $region3: #{net_forward.1} parent=1 // pred_check_branch
      %17 = sbr.rel (0) target = $region5
    $region4: #{net_forward.1} parent=1 // pred_region
      _
    $region5: #{net_forward.1} parent=1 // pred_fallthru
      _
    // Predicated region
    $region6: #{net_forward.1} parent=1 // pred_check
      _
    $region7: #{net_forward.1} parent=1 // pred_check_branch
      %19 = sbr.rel (0) target = $region9
    $region8: #{net_forward.1} parent=1 // pred_region
      _
    $region9: #{net_forward.1} parent=1 // pred_fallthru
      _
    // Predicated region
    $region10: #{net_forward.1} parent=1 // pred_check
      _
    $region11: #{net_forward.1} parent=1 // pred_check_branch
      %21 = sbr.rel (0) target = $region13
    $region12: #{net_forward.1} parent=1 // pred_region
      _
    $region13: #{net_forward.1} parent=1 // pred_fallthru
      _
    // Predicated region
    $region14: #{net_forward.1} parent=1 // pred_check
      _
    $region15: #{net_forward.1} parent=1 // pred_check_branch
      %23 = sbr.rel (0) target = $region17
    $region16: #{net_forward.1} parent=1 // pred_region
      _
    $region17: #{net_forward.1} parent=1 // pred_fallthru
      _
    // Predicated region
    $region18: #{net_forward.1} parent=1 // pred_check
      _
    $region19: #{net_forward.1} parent=1 // pred_check_branch
      %25 = sbr.rel (0) target = $region21
    $region20: #{net_forward.1} parent=1 // pred_region
      _
    $region21: #{net_forward.1} parent=1 // pred_fallthru
      _
    // Predicated region
    $region22: #{net_forward.1} parent=1 // pred_check
      _
    $region23: #{net_forward.1} parent=1 // pred_check_branch
      %27 = sbr.rel (0) target = $region25
    $region24: #{net_forward.1} parent=1 // pred_region
      %s29 = ssub.s32 2048, 2048
      %30 = vsyncadd [#allocation3], %s29
      %s31 = sshll.u32 [#allocation2], 4
      %s32 = int_to_ptr.vmem [resolvable:$true] %s31
      %37 = dma.hbm_to_vmem [thread:$0]  %s5, 2048, %s32, [#allocation3], 128, 128, 8
    $region25: #{net_forward.1} parent=1 // pred_fallthru
      _
    // Predicated region
    $region26: #{net_forward.1} parent=1 // pred_check
      _
    $region27: #{net_forward.1} parent=1 // pred_check_branch
      %39 = sbr.rel (0) target = $region29
    $region28: #{net_forward.1} parent=1 // pred_region
      _
    $region29: #{net_forward.1} parent=1 // pred_fallthru
      _
    // Predicated region
    $region30: #{net_forward.1} parent=1 // pred_check
      _
    $region31: #{net_forward.1} parent=1 // pred_check_branch
      %41 = sbr.rel (0) target = $region33
    $region32: #{net_forward.1} parent=1 // pred_region
      _
    $region33: #{net_forward.1} parent=1 // pred_fallthru
      _
    // Predicated region
    $region34: #{net_forward.1} parent=1 // pred_check
      _
    $region35: #{net_forward.1} parent=1 // pred_check_branch
      %43 = sbr.rel (0) target = $region37
    $region36: #{net_forward.1} parent=1 // pred_region
      _
    $region37: #{net_forward.1} parent=1 // pred_fallthru
      _
    // Predicated region
    $region38: #{net_forward.1} parent=1 // pred_check
      _
    $region39: #{net_forward.1} parent=1 // pred_check_branch
      %45 = sbr.rel (0) target = $region41
    $region40: #{net_forward.1} parent=1 // pred_region
      %46 = dma.done [#allocation3], 2048
    $region41: #{net_forward.1} parent=1 // pred_fallthru
      _
    %v47 = vld [vmem:[%s0] sm:$0xff]
    %v48 = vld [vmem:[%s1] sm:$0xff]
    %v49 = vld [vmem:[%s1 + $0x8] sm:$0x1f]
    %v50 = vld [vmem:[%s2] sm:$0x1]
    %v52 = vlaneseq
    %v53 = vshrl.u32 %v52, 7
    %v54 = vsub.s32 0, %v53
    %v55 = vrot.slane %v50, %v54
    %vm57 = vcmask 105472
    %v59 = vsel %vm57, %v47, 0
    %vm61 = vcmask 1044480
    %v63 = vsel %vm61, %v49, 0
    %65 = vmatprep.subr.mxu0 0.0
    %66 = vmatpush1.msra.mxu0 %v48
    %67 = vmatprep.subr.mxu0 0.0
    %68 = vmatpush1.msra.mxu0 %v63
    %69 = vmatprep.subr.mxu0 0.0
    %70 = vmatpush1.msra.mxu0 0.0
    %71 = vmatprep.subr.mxu0 0.0
    %72 = vmatpush1.msra.mxu0 0.0
    %73 = vmatprep.subr.mxu0 0.0
    %74 = vmatpush1.msra.mxu0 0.0
    %75 = vmatprep.subr.mxu0 0.0
    %76 = vmatpush1.msra.mxu0 0.0
    %77 = vmatprep.subr.mxu0 0.0
    %78 = vmatpush1.msra.mxu0 0.0
    %79 = vmatprep.subr.mxu0 0.0
    %80 = vmatpush1.msra.mxu0 0.0
    %81 = vmatprep.subr.mxu0 0.0
    %82 = vmatpush1.msra.mxu0 0.0
    %83 = vmatprep.subr.mxu0 0.0
    %84 = vmatpush1.msra.mxu0 0.0
    %85 = vmatprep.subr.mxu0 0.0
    %86 = vmatpush1.msra.mxu0 0.0
    %87 = vmatprep.subr.mxu0 0.0
    %88 = vmatpush1.msra.mxu0 0.0
    %89 = vmatprep.subr.mxu0 0.0
    %90 = vmatpush1.msra.mxu0 0.0
    %91 = vmatprep.subr.mxu0 0.0
    %92 = vmatpush1.msra.mxu0 0.0
    %93 = vmatprep.subr.mxu0 0.0
    %94 = vmatpush1.msra.mxu0 0.0
    %95 = vmatprep.subr.mxu0 0.0
    %96 = vmatpush1.msra.mxu0 0.0
    %97 = vmatprep.subr.mxu0 0.0
    %98 = vmatpush1.msra.mxu0 0.0
    %99 = vmatprep.subr.mxu0 0.0
    %100 = vmatpush1.msra.mxu0 0.0
    %101 = vmatprep.subr.mxu0 0.0
    %102 = vmatpush1.msra.mxu0 0.0
    %103 = vmatprep.subr.mxu0 0.0
    %104 = vmatpush1.msra.mxu0 0.0
    %105 = vmatprep.subr.mxu0 0.0
    %106 = vmatpush1.msra.mxu0 0.0
    %107 = vmatprep.subr.mxu0 0.0
    %108 = vmatpush1.msra.mxu0 0.0
    %109 = vmatprep.subr.mxu0 0.0
    %110 = vmatpush1.msra.mxu0 0.0
    %111 = vmatprep.subr.mxu0 0.0
    %112 = vmatpush1.msra.mxu0 0.0
    %113 = vmatprep.subr.mxu0 0.0
    %114 = vmatpush1.msra.mxu0 0.0
    %115 = vmatprep.subr.mxu0 0.0
    %116 = vmatpush1.msra.mxu0 0.0
    %117 = vmatprep.subr.mxu0 0.0
    %118 = vmatpush1.msra.mxu0 0.0
    %119 = vmatprep.subr.mxu0 0.0
    %120 = vmatpush1.msra.mxu0 0.0
    %121 = vmatprep.subr.mxu0 0.0
    %122 = vmatpush1.msra.mxu0 0.0
    %123 = vmatprep.subr.mxu0 0.0
    %124 = vmatpush1.msra.mxu0 0.0
    %125 = vmatprep.subr.mxu0 0.0
    %126 = vmatpush1.msra.mxu0 0.0
    %127 = vmatprep.subr.mxu0 0.0
    %128 = vmatpush1.msra.mxu0 0.0
    %129 = vmatprep.mubr.f32.mxu0 0.0
    %130 = vmatmul.mubr.f32.gmra.mrb[0].mxu0 %v59
    %v131 = vpop.f32.mrb[0].mxu0
    %v132 = vadd.f32 %v55, %v131
    %v133 = vpop.f32.mrb[0].mxu0
    %134 = vdwg.mxu0
    %v135 = vmax.f32 %v132, 0.0
    %v136 = vld [vmem:[%s3] sm:$0xff]
    %v137 = vld [vmem:[%s3 + $0x8] sm:$0xff]
    %v138 = vld [vmem:[%s3 + $0x10] sm:$0xff]
    %v139 = vld [vmem:[%s3 + $0x18] sm:$0xff]
    %v140 = vld [vmem:[%s3 + $0x20] sm:$0xff]
    %v141 = vld [vmem:[%s3 + $0x28] sm:$0xff]
    %v142 = vld [vmem:[%s3 + $0x30] sm:$0xff]
    %v143 = vld [vmem:[%s3 + $0x38] sm:$0xff]
    %v144 = vld [vmem:[%s3 + $0x40] sm:$0xff]
    %v145 = vld [vmem:[%s3 + $0x48] sm:$0xff]
    %v146 = vld [vmem:[%s3 + $0x50] sm:$0xff]
    %v147 = vld [vmem:[%s3 + $0x58] sm:$0xff]
    %v148 = vld [vmem:[%s3 + $0x60] sm:$0xff]
    %v149 = vld [vmem:[%s3 + $0x68] sm:$0xff]
    %v150 = vld [vmem:[%s3 + $0x70] sm:$0xff]
    %v151 = vld [vmem:[%s3 + $0x78] sm:$0xff]
    %v152 = vld [vmem:[%s4] sm:$0x1]
    %v154 = vlaneseq
    %v155 = vshrl.u32 %v154, 7
    %v156 = vsub.s32 0, %v155
    %v157 = vrot.slane %v152, %v156
    %159 = vmatprep.subr.mxu0 0.0
    %160 = vmatpush1.msra.mxu0 %v136
    %161 = vmatprep.subr.mxu0 0.0
    %162 = vmatpush1.msra.mxu0 %v137
    %163 = vmatprep.subr.mxu0 0.0
    %164 = vmatpush1.msra.mxu0 %v138
    %165 = vmatprep.subr.mxu0 0.0
    %166 = vmatpush1.msra.mxu0 %v139
    %167 = vmatprep.subr.mxu0 0.0
    %168 = vmatpush1.msra.mxu0 %v140
    %169 = vmatprep.subr.mxu0 0.0
    %170 = vmatpush1.msra.mxu0 %v141
    %171 = vmatprep.subr.mxu0 0.0
    %172 = vmatpush1.msra.mxu0 %v142
    %173 = vmatprep.subr.mxu0 0.0
    %174 = vmatpush1.msra.mxu0 %v143
    %175 = vmatprep.subr.mxu0 0.0
    %176 = vmatpush1.msra.mxu0 %v144
    %177 = vmatprep.subr.mxu0 0.0
    %178 = vmatpush1.msra.mxu0 %v145
    %179 = vmatprep.subr.mxu0 0.0
    %180 = vmatpush1.msra.mxu0 %v146
    %181 = vmatprep.subr.mxu0 0.0
    %182 = vmatpush1.msra.mxu0 %v147
    %183 = vmatprep.subr.mxu0 0.0
    %184 = vmatpush1.msra.mxu0 %v148
    %185 = vmatprep.subr.mxu0 0.0
    %186 = vmatpush1.msra.mxu0 %v149
    %187 = vmatprep.subr.mxu0 0.0
    %188 = vmatpush1.msra.mxu0 %v150
    %189 = vmatprep.subr.mxu0 0.0
    %190 = vmatpush1.msra.mxu0 %v151
    %191 = vmatprep.subr.mxu0 0.0
    %192 = vmatpush1.msra.mxu0 0.0
    %193 = vmatprep.subr.mxu0 0.0
    %194 = vmatpush1.msra.mxu0 0.0
    %195 = vmatprep.subr.mxu0 0.0
    %196 = vmatpush1.msra.mxu0 0.0
    %197 = vmatprep.subr.mxu0 0.0
    %198 = vmatpush1.msra.mxu0 0.0
    %199 = vmatprep.subr.mxu0 0.0
    %200 = vmatpush1.msra.mxu0 0.0
    %201 = vmatprep.subr.mxu0 0.0
    %202 = vmatpush1.msra.mxu0 0.0
    %203 = vmatprep.subr.mxu0 0.0
    %204 = vmatpush1.msra.mxu0 0.0
    %205 = vmatprep.subr.mxu0 0.0
    %206 = vmatpush1.msra.mxu0 0.0
    %207 = vmatprep.subr.mxu0 0.0
    %208 = vmatpush1.msra.mxu0 0.0
    %209 = vmatprep.subr.mxu0 0.0
    %210 = vmatpush1.msra.mxu0 0.0
    %211 = vmatprep.subr.mxu0 0.0
    %212 = vmatpush1.msra.mxu0 0.0
    %213 = vmatprep.subr.mxu0 0.0
    %214 = vmatpush1.msra.mxu0 0.0
    %215 = vmatprep.subr.mxu0 0.0
    %216 = vmatpush1.msra.mxu0 0.0
    %217 = vmatprep.subr.mxu0 0.0
    %218 = vmatpush1.msra.mxu0 0.0
    %219 = vmatprep.subr.mxu0 0.0
    %220 = vmatpush1.msra.mxu0 0.0
    %221 = vmatprep.subr.mxu0 0.0
    %222 = vmatpush1.msra.mxu0 0.0
    %223 = vmatprep.mubr.f32.mxu0 0.0
    %224 = vmatmul.mubr.f32.gmra.mrb[0].mxu0 %v135
    %v225 = vpop.f32.mrb[0].mxu0
    %v226 = vadd.f32 %v157, %v225
    %v227 = vpop.f32.mrb[0].mxu0
    %228 = vdwg.mxu0
    %v229 = vtanh.pop %v226
    %v230 = vld [vmem:[#allocation2] sm:$0xff]
    %v231 = vld [vmem:[#allocation2 + $0x8] sm:$0xff]
    %v232 = vld [vmem:[#allocation2 + $0x10] sm:$0xff]
    %v233 = vld [vmem:[#allocation2 + $0x18] sm:$0xff]
    %v234 = vld [vmem:[#allocation2 + $0x20] sm:$0xff]
    %v235 = vld [vmem:[#allocation2 + $0x28] sm:$0xff]
    %v236 = vld [vmem:[#allocation2 + $0x30] sm:$0xff]
    %v237 = vld [vmem:[#allocation2 + $0x38] sm:$0xff]
    %v238 = vld [vmem:[#allocation2 + $0x40] sm:$0xff]
    %v239 = vld [vmem:[#allocation2 + $0x48] sm:$0xff]
    %v240 = vld [vmem:[#allocation2 + $0x50] sm:$0xff]
    %v241 = vld [vmem:[#allocation2 + $0x58] sm:$0xff]
    %v242 = vld [vmem:[#allocation2 + $0x60] sm:$0xff]
    %v243 = vld [vmem:[#allocation2 + $0x68] sm:$0xff]
    %v244 = vld [vmem:[#allocation2 + $0x70] sm:$0xff]
    %v245 = vld [vmem:[#allocation2 + $0x78] sm:$0xff]
    %v246 = vld [vmem:[%s6] sm:$0x1]
    %v248 = vlaneseq
    %v249 = vshrl.u32 %v248, 7
    %v250 = vsub.s32 0, %v249
    %v251 = vrot.slane %v246, %v250
    %253 = vmatprep.subr.mxu0 0.0
    %254 = vmatpush1.msra.mxu0 %v230
    %255 = vmatprep.subr.mxu0 0.0
    %256 = vmatpush1.msra.mxu0 %v231
    %257 = vmatprep.subr.mxu0 0.0
    %258 = vmatpush1.msra.mxu0 %v232
    %259 = vmatprep.subr.mxu0 0.0
    %260 = vmatpush1.msra.mxu0 %v233
    %261 = vmatprep.subr.mxu0 0.0
    %262 = vmatpush1.msra.mxu0 %v234
    %263 = vmatprep.subr.mxu0 0.0
    %264 = vmatpush1.msra.mxu0 %v235
    %265 = vmatprep.subr.mxu0 0.0
    %266 = vmatpush1.msra.mxu0 %v236
    %267 = vmatprep.subr.mxu0 0.0
    %268 = vmatpush1.msra.mxu0 %v237
    %269 = vmatprep.subr.mxu0 0.0
    %270 = vmatpush1.msra.mxu0 %v238
    %271 = vmatprep.subr.mxu0 0.0
    %272 = vmatpush1.msra.mxu0 %v239
    %273 = vmatprep.subr.mxu0 0.0
    %274 = vmatpush1.msra.mxu0 %v240
    %275 = vmatprep.subr.mxu0 0.0
    %276 = vmatpush1.msra.mxu0 %v241
    %277 = vmatprep.subr.mxu0 0.0
    %278 = vmatpush1.msra.mxu0 %v242
    %279 = vmatprep.subr.mxu0 0.0
    %280 = vmatpush1.msra.mxu0 %v243
    %281 = vmatprep.subr.mxu0 0.0
    %282 = vmatpush1.msra.mxu0 %v244
    %283 = vmatprep.subr.mxu0 0.0
    %284 = vmatpush1.msra.mxu0 %v245
    %285 = vmatprep.subr.mxu0 0.0
    %286 = vmatpush1.msra.mxu0 0.0
    %287 = vmatprep.subr.mxu0 0.0
    %288 = vmatpush1.msra.mxu0 0.0
    %289 = vmatprep.subr.mxu0 0.0
    %290 = vmatpush1.msra.mxu0 0.0
    %291 = vmatprep.subr.mxu0 0.0
    %292 = vmatpush1.msra.mxu0 0.0
    %293 = vmatprep.subr.mxu0 0.0
    %294 = vmatpush1.msra.mxu0 0.0
    %295 = vmatprep.subr.mxu0 0.0
    %296 = vmatpush1.msra.mxu0 0.0
    %297 = vmatprep.subr.mxu0 0.0
    %298 = vmatpush1.msra.mxu0 0.0
    %299 = vmatprep.subr.mxu0 0.0
    %300 = vmatpush1.msra.mxu0 0.0
    %301 = vmatprep.subr.mxu0 0.0
    %302 = vmatpush1.msra.mxu0 0.0
    %303 = vmatprep.subr.mxu0 0.0
    %304 = vmatpush1.msra.mxu0 0.0
    %305 = vmatprep.subr.mxu0 0.0
    %306 = vmatpush1.msra.mxu0 0.0
    %307 = vmatprep.subr.mxu0 0.0
    %308 = vmatpush1.msra.mxu0 0.0
    %309 = vmatprep.subr.mxu0 0.0
    %310 = vmatpush1.msra.mxu0 0.0
    %311 = vmatprep.subr.mxu0 0.0
    %312 = vmatpush1.msra.mxu0 0.0
    %313 = vmatprep.subr.mxu0 0.0
    %314 = vmatpush1.msra.mxu0 0.0
    %315 = vmatprep.subr.mxu0 0.0
    %316 = vmatpush1.msra.mxu0 0.0
    %317 = vmatprep.mubr.f32.mxu0 0.0
    %318 = vmatmul.mubr.f32.gmra.mrb[0].mxu0 %v229
    %v319 = vpop.f32.mrb[0].mxu0
    %v320 = vadd.f32 %v251, %v319
    %v321 = vpop.f32.mrb[0].mxu0
    %322 = vdwg.mxu0
    %v323 = vxor.u32 %v320, 2147483648
    %v324 = vmul.f32 %v323, 1.442695
    %v325 = vpow.pop %v324
    %v326 = vadd.f32 %v325, 1.0
    %v327 = vrcp.pop %v326
    %v328 = vmul.f32 1.0, %v327
    %v329 = vld [vmem:[%s7] sm:$0xff]
    %v330 = vld [vmem:[%s7 + $0x8] sm:$0xff]
    %v331 = vld [vmem:[%s7 + $0x10] sm:$0xff]
    %v332 = vld [vmem:[%s7 + $0x18] sm:$0xff]
    %v333 = vld [vmem:[%s7 + $0x20] sm:$0xff]
    %v334 = vld [vmem:[%s7 + $0x28] sm:$0xff]
    %v335 = vld [vmem:[%s7 + $0x30] sm:$0xff]
    %v336 = vld [vmem:[%s7 + $0x38] sm:$0xff]
    %v337 = vld [vmem:[%s7 + $0x40] sm:$0xff]
    %v338 = vld [vmem:[%s7 + $0x48] sm:$0xff]
    %v339 = vld [vmem:[%s7 + $0x50] sm:$0xff]
    %v340 = vld [vmem:[%s7 + $0x58] sm:$0xff]
    %v341 = vld [vmem:[%s7 + $0x60] sm:$0xff]
    %v342 = vld [vmem:[%s7 + $0x68] sm:$0xff]
    %v343 = vld [vmem:[%s7 + $0x70] sm:$0xff]
    %v344 = vld [vmem:[%s7 + $0x78] sm:$0xff]
    %v345 = vld [vmem:[%s8] sm:$0x1]
    %v347 = vlaneseq
    %v348 = vshrl.u32 %v347, 7
    %v349 = vsub.s32 0, %v348
    %v350 = vrot.slane %v345, %v349
    %352 = vmatprep.subr.mxu0 0.0
    %353 = vmatpush1.msra.mxu0 %v329
    %354 = vmatprep.subr.mxu0 0.0
    %355 = vmatpush1.msra.mxu0 %v330
    %356 = vmatprep.subr.mxu0 0.0
    %357 = vmatpush1.msra.mxu0 %v331
    %358 = vmatprep.subr.mxu0 0.0
    %359 = vmatpush1.msra.mxu0 %v332
    %360 = vmatprep.subr.mxu0 0.0
    %361 = vmatpush1.msra.mxu0 %v333
    %362 = vmatprep.subr.mxu0 0.0
    %363 = vmatpush1.msra.mxu0 %v334
    %364 = vmatprep.subr.mxu0 0.0
    %365 = vmatpush1.msra.mxu0 %v335
    %366 = vmatprep.subr.mxu0 0.0
    %367 = vmatpush1.msra.mxu0 %v336
    %368 = vmatprep.subr.mxu0 0.0
    %369 = vmatpush1.msra.mxu0 %v337
    %370 = vmatprep.subr.mxu0 0.0
    %371 = vmatpush1.msra.mxu0 %v338
    %372 = vmatprep.subr.mxu0 0.0
    %373 = vmatpush1.msra.mxu0 %v339
    %374 = vmatprep.subr.mxu0 0.0
    %375 = vmatpush1.msra.mxu0 %v340
    %376 = vmatprep.subr.mxu0 0.0
    %377 = vmatpush1.msra.mxu0 %v341
    %378 = vmatprep.subr.mxu0 0.0
    %379 = vmatpush1.msra.mxu0 %v342
    %380 = vmatprep.subr.mxu0 0.0
    %381 = vmatpush1.msra.mxu0 %v343
    %382 = vmatprep.subr.mxu0 0.0
    %383 = vmatpush1.msra.mxu0 %v344
    %384 = vmatprep.subr.mxu0 0.0
    %385 = vmatpush1.msra.mxu0 0.0
    %386 = vmatprep.subr.mxu0 0.0
    %387 = vmatpush1.msra.mxu0 0.0
    %388 = vmatprep.subr.mxu0 0.0
    %389 = vmatpush1.msra.mxu0 0.0
    %390 = vmatprep.subr.mxu0 0.0
    %391 = vmatpush1.msra.mxu0 0.0
    %392 = vmatprep.subr.mxu0 0.0
    %393 = vmatpush1.msra.mxu0 0.0
    %394 = vmatprep.subr.mxu0 0.0
    %395 = vmatpush1.msra.mxu0 0.0
    %396 = vmatprep.subr.mxu0 0.0
    %397 = vmatpush1.msra.mxu0 0.0
    %398 = vmatprep.subr.mxu0 0.0
    %399 = vmatpush1.msra.mxu0 0.0
    %400 = vmatprep.subr.mxu0 0.0
    %401 = vmatpush1.msra.mxu0 0.0
    %402 = vmatprep.subr.mxu0 0.0
    %403 = vmatpush1.msra.mxu0 0.0
    %404 = vmatprep.subr.mxu0 0.0
    %405 = vmatpush1.msra.mxu0 0.0
    %406 = vmatprep.subr.mxu0 0.0
    %407 = vmatpush1.msra.mxu0 0.0
    %408 = vmatprep.subr.mxu0 0.0
    %409 = vmatpush1.msra.mxu0 0.0
    %410 = vmatprep.subr.mxu0 0.0
    %411 = vmatpush1.msra.mxu0 0.0
    %412 = vmatprep.subr.mxu0 0.0
    %413 = vmatpush1.msra.mxu0 0.0
    %414 = vmatprep.subr.mxu0 0.0
    %415 = vmatpush1.msra.mxu0 0.0
    %416 = vmatprep.mubr.f32.mxu0 0.0
    %417 = vmatmul.mubr.f32.gmra.mrb[0].mxu0 %v328
    %v418 = vpop.f32.mrb[0].mxu0
    %v419 = vadd.f32 %v350, %v418
    %v420 = vpop.f32.mrb[0].mxu0
    %421 = vdwg.mxu0
    %vm422 = vcmask 39936
    %423 = vst.msk [vmem:[#allocation5] sm:$0xff] %vm422, %v419
    // Predicated region
    $region42: #{net_forward.1} parent=1 // pred_check
      _
    $region43: #{net_forward.1} parent=1 // pred_check_branch
      %425 = sbr.rel (0) target = $region45
    $region44: #{net_forward.1} parent=1 // pred_region
      %s427 = ssub.s32 128, 64
      %428 = vsyncadd [#allocation4], %s427
      %s429 = sshll.u32 [#allocation5], 4
      %s430 = int_to_ptr.vmem [resolvable:$true] %s429
      %435 = dma.vmem_to_hbm [thread:$0]  %s430, 64, %s9, [#allocation4], 64, 64, 4
    $region45: #{net_forward.1} parent=1 // pred_fallthru
      _
    // Predicated region
    $region46: #{net_forward.1} parent=1 // pred_check
      _
    $region47: #{net_forward.1} parent=1 // pred_check_branch
      %437 = sbr.rel (0) target = $region49
    $region48: #{net_forward.1} parent=1 // pred_region
      %438 = dma.done [#allocation4], 128
    $region49: #{net_forward.1} parent=1 // pred_fallthru
      _
    %439 = vsyncpa [#allocation3], 1
    %440 = vsyncpa [#allocation4], 1

</llo_original>
